<compile_context>
chip_gen: v6e
topology: v6e:2x2x1
jax: 0.10.0
libtpu: 0.0.40
codegen_flags: <defaults>
</compile_context>

<pallas_src>
import functools

import jax
import jax.numpy as jnp
from jax.experimental import pallas as pl
from jax.experimental.pallas import tpu as pltpu


def _root_kernel(*refs, n_children, residual, nb, concat, c_sizes, slot_sizes):
    # refs layout:
    #   concat=True : x_0..x_{n-1} (nb,C_i,thw), w_cat (Cout,Cin_pad),
    #                 shift (Cout,1) f32, out (nb,Cout,thw), xcat scratch (Cin_pad,thw)
    #   concat=False: x_0..x_{n-1} (nb,C_i,thw), w_0..w_{n-1} (Cout,C_i),
    #                 shift (Cout,1) f32, out (nb,Cout,thw)
    x_refs = refs[:n_children]
    if concat:
        w_ref = refs[n_children]
        shift_ref = refs[n_children + 1]
        o_ref = refs[n_children + 2]
        xcat_ref = refs[n_children + 3]
        w_refs = None
    else:
        w_refs = refs[n_children:2 * n_children]
        shift_ref = refs[2 * n_children]
        o_ref = refs[2 * n_children + 1]
        xcat_ref = None

    shift = shift_ref[...]                             # (Cout, 1) f32, lane-broadcast

    for n in range(nb):                                # static loop over grouped images
        if concat:
            # Pack all children into one (Cin_pad, thw) VMEM tile so the 1x1 conv
            # is a single full-K MXU matmul.  Slots are sublane/packing aligned,
            # padded rows are written as zeros (weight pad columns are zero too).
            off = 0
            for i in range(n_children):
                cs, slot = c_sizes[i], slot_sizes[i]
                x = x_refs[i][n]                       # (C_i, thw)
                if slot != cs:
                    x = jnp.concatenate(
                        [x, jnp.zeros((slot - cs, x.shape[-1]), x.dtype)], axis=0)
                xcat_ref[pl.ds(off, slot), :] = x      # aligned, unmasked store
                off += slot
            acc = jnp.dot(w_ref[...], xcat_ref[...],
                          preferred_element_type=jnp.float32)
        else:
            acc = jnp.dot(w_refs[0][...], x_refs[0][n],
                          preferred_element_type=jnp.float32)
            for i in range(1, n_children):
                acc = acc + jnp.dot(w_refs[i][...], x_refs[i][n],
                                    preferred_element_type=jnp.float32)

        acc = acc + shift                              # folded BN shift
        if residual:                                   # reuse child-0 stream (no extra DMA)
            acc = acc + x_refs[0][n].astype(jnp.float32)
        o_ref[n] = jnp.maximum(acc, 0.0).astype(o_ref.dtype)


def _vmem_params():
    """(vmem_limit_bytes, per-call tile budget) chosen per TPU generation."""
    try:
        cap = int(pltpu.get_tpu_info().vmem_capacity_bytes)
    except Exception:
        cap = 64 << 20                                 # assume the smallest (v7x)
    if cap <= (64 << 20):                              # v7x: 64 MiB per TensorCore
        return 40 << 20, 14 << 20
    return 80 << 20, 36 << 20                          # v5e / v6e: 128 MiB per TC


def _plan_tiling(N, HW, cin, cin_pad, cout, itemsize, *, use_concat, residual,
                 budget_bytes, max_tile=2048):
    """Pick (nb, thw): images per grid step and H*W lanes per tile."""
    # per-lane costs (bytes per thw unit)
    stream = 2 * (cin + cout) * itemsize               # double-buffered child + out streams / image
    live = 2 * cout * 4                                # live f32 intermediates from dot/epilogue
    if residual:
        live += 4 * cout                               # f32 cast of children[0] (c0 == cout)
    if use_concat:
        live += cin_pad * itemsize                     # packed-children scratch
    fixed = 2 * cout * cin_pad * itemsize + 2 * cout * 4   # weights (<=2 bufs) + shift
    avail = max(budget_bytes - fixed, (stream + live) * 128)

    # Small-HW regime (deep DLA roots, HW=49/196): group several images per grid
    # step to amortize the ~0.35us per-step overhead.
    nb = 1
    if HW < 512 and N > 1:
        nb_budget = max(1, (avail - live * HW) // max(1, stream * HW))
        nb = int(max(1, min(N, 2048 // max(HW, 1), nb_budget)))

    if HW <= 128:
        thw = HW                                       # full dim is always legal
    else:
        thw = avail // (nb * stream + live)
        thw = int(min(thw, max_tile, HW))
        if thw < HW:
            thw = max(128, (thw // 128) * 128)         # legal block: multiple of 128

    # keep >= 2 grid steps so both v7x TensorCores get work
    if pl.cdiv(HW, thw) == 1:
        if N >= 2:
            nb = min(nb, pl.cdiv(N, 2))
        elif HW >= 256:
            thw = max(128, ((HW // 2) // 128) * 128)
    return nb, thw


def root_forward(children, weight, gamma, beta, running_mean, running_var,
                 *, residual, eps=1e-5, kernel_size=1, compute_dtype=None):
    """children: list of NCHW arrays. weight: (Cout, sum(C_i), 1, 1) (no bias)."""
    # TODO(synk): DLA always builds Root with kernel_size=1 (padding 0); the
    # Conv2d(padding=(kernel_size-1)//2) corner case for kernel_size>1 is not
    # implemented here.
    if kernel_size != 1:
        raise NotImplementedError("Root Pallas kernel supports kernel_size=1 only")

    n_children = len(children)
    if compute_dtype is not None:                      # e.g. stream f32 inputs as bf16
        children = [c.astype(compute_dtype) for c in children]
    N, _, H, W = children[0].shape
    c_sizes = tuple(int(c.shape[1]) for c in children)
    Cin = sum(c_sizes)
    Cout = int(weight.shape[0])
    HW = H * W
    dtype = children[0].dtype
    itemsize = jnp.dtype(dtype).itemsize

    if residual and c_sizes[0] != Cout:
        raise ValueError(
            f"residual=True requires children[0] channels ({c_sizes[0]}) == "
            f"out_channels ({Cout})")

    # ---- fold BatchNorm (running stats) into the conv weight + a shift ----
    inv = jax.lax.rsqrt(running_var.astype(jnp.float32) + eps)
    scale = gamma.astype(jnp.float32) * inv                        # (Cout,)
    shift = (beta.astype(jnp.float32)
             - running_mean.astype(jnp.float32) * scale).reshape(Cout, 1)
    w_full = weight.reshape(Cout, Cin).astype(jnp.float32) * scale[:, None]

    # Strategy: single full-K dot (children packed in VMEM) when any child is
    # narrower than the MXU contraction depth or there are many children.
    use_concat = (n_children > 2) or (min(c_sizes) < 128)
    align = 8 * max(1, 4 // itemsize)                  # sublane/packing alignment
    if use_concat:
        slot_sizes = tuple(-(-cs // align) * align for cs in c_sizes)
    else:
        slot_sizes = c_sizes
    cin_pad = sum(slot_sizes)

    # weight operands (BN-scale folded), in the I/O dtype
    w_ops = []
    off = 0
    if use_concat:
        cols = []
        for cs, slot in zip(c_sizes, slot_sizes):
            wi = w_full[:, off:off + cs]
            if slot != cs:
                wi = jnp.pad(wi, ((0, 0), (0, slot - cs)))         # zero pad columns
            cols.append(wi)
            off += cs
        w_ops.append(jnp.concatenate(cols, axis=1).astype(dtype))  # (Cout, Cin_pad)
    else:
        for cs in c_sizes:
            w_ops.append(w_full[:, off:off + cs].astype(dtype))    # (Cout, C_i)
            off += cs

    # NCHW -> (N, C, H*W): merging contiguous trailing dims, no data movement
    x_flat = [c.reshape(N, cs, HW) for c, cs in zip(children, c_sizes)]

    vmem_limit, budget = _vmem_params()
    nb, thw = _plan_tiling(N, HW, Cin, cin_pad, Cout, itemsize,
                           use_concat=use_concat, residual=residual,
                           budget_bytes=budget)
    n_batch_blocks = pl.cdiv(N, nb)
    n_hw_blocks = pl.cdiv(HW, thw)

    kernel = functools.partial(_root_kernel, n_children=n_children,
                               residual=residual, nb=nb, concat=use_concat,
                               c_sizes=c_sizes, slot_sizes=slot_sizes)

    cost = pl.CostEstimate(
        flops=2 * Cin * Cout * N * HW + 3 * Cout * N * HW,
        transcendentals=0,
        bytes_accessed=(Cin + Cout) * N * HW * itemsize
                       + Cout * cin_pad * itemsize + Cout * 4,
    )

    scratch = [pltpu.VMEM((cin_pad, thw), dtype)] if use_concat else []

    x_specs = [pl.BlockSpec((nb, cs, thw), lambda b, j: (b, 0, j))
               for cs in c_sizes]
    out_spec = pl.BlockSpec((nb, Cout, thw), lambda b, j: (b, 0, j))

    def _const_spec(shape, single_buffer):
        zeros = (0,) * len(shape)
        index_map = lambda b, j: zeros
        if single_buffer:
            # grid-constant operand: one VMEM buffer instead of two
            return pl.BlockSpec(shape, index_map, pipeline_mode=pl.Buffered(1))
        return pl.BlockSpec(shape, index_map)

    def _run(single_buffer_consts):
        in_specs = (x_specs
                    + [_const_spec(w.shape, single_buffer_consts) for w in w_ops]
                    + [_const_spec((Cout, 1), single_buffer_consts)])
        return pl.pallas_call(
            kernel,
            out_shape=jax.ShapeDtypeStruct((N, Cout, HW), dtype),
            grid_spec=pltpu.PrefetchScalarGridSpec(
                num_scalar_prefetch=0,
                grid=(n_batch_blocks, n_hw_blocks),
                in_specs=in_specs,
                out_specs=out_spec,
                scratch_shapes=scratch,
            ),
            compiler_params=pltpu.CompilerParams(
                dimension_semantics=("parallel", "parallel"),
                vmem_limit_bytes=vmem_limit,
            ),
            cost_estimate=cost,
        )(*x_flat, *w_ops, shift)

    try:
        out = _run(True)
    except Exception:
        # pl.Buffered(1) single-buffering unsupported on this JAX version:
        # fall back to default double buffering for the grid-constant operands.
        out = _run(False)

    return out.reshape(N, Cout, H, W)


def _reference(children, weight, gamma, beta, running_mean, running_var,
               *, residual, eps=1e-5):
    x = jnp.concatenate(children, axis=1)
    w = weight.reshape(weight.shape[0], weight.shape[1])           # (Cout, Cin)
    y = jnp.einsum("nchw,oc->nohw", x, w, precision=jax.lax.Precision.HIGHEST)
    inv = 1.0 / jnp.sqrt(running_var + eps)
    y = (y - running_mean[None, :, None, None]) * (gamma * inv)[None, :, None, None] \
        + beta[None, :, None, None]
    if residual:
        y = y + children[0]
    return jnp.maximum(y, 0.0)


def _run_case(key, *, name, N, H, W, c_sizes, Cout, residual, dtype, atol, rtol):
    keys = jax.random.split(key, len(c_sizes) + 5)
    Cin = sum(c_sizes)
    children = [jax.random.normal(keys[i], (N, cs, H, W), jnp.float32)
                for i, cs in enumerate(c_sizes)]
    weight = jax.random.normal(keys[-5], (Cout, Cin, 1, 1), jnp.float32) * 0.1
    gamma = 1.0 + 0.1 * jax.random.normal(keys[-4], (Cout,), jnp.float32)
    beta = 0.1 * jax.random.normal(keys[-3], (Cout,), jnp.float32)
    running_mean = 0.1 * jax.random.normal(keys[-2], (Cout,), jnp.float32)
    running_var = jnp.abs(1.0 + 0.1 * jax.random.normal(keys[-1], (Cout,), jnp.float32))

    children_io = [c.astype(dtype) for c in children]
    out = root_forward(children_io, weight, gamma, beta, running_mean, running_var,
                       residual=residual)
    out = jax.block_until_ready(out)

    ref = _reference([c.astype(jnp.float32) for c in children_io],
                     weight, gamma, beta, running_mean, running_var,
                     residual=residual)
    assert out.shape == (N, Cout, H, W), name
    err = jnp.max(jnp.abs(out.astype(jnp.float32) - ref))
    assert jnp.allclose(out.astype(jnp.float32), ref, atol=atol, rtol=rtol), \
        f"{name}: max abs err {err}"


if __name__ == "__main__":
    root_key = jax.random.PRNGKey(0)
    cases = [
        # narrow channels -> packed single-dot path, f32, residual
        dict(name="f32-small-concat", N=2, H=16, W=16, c_sizes=(4, 4), Cout=4,
             residual=True, dtype=jnp.float32, atol=1e-4, rtol=1e-4),
        # wide channels -> per-child dot path, single image, HW split for 2 TCs
        dict(name="f32-perchild-dots", N=1, H=16, W=16, c_sizes=(128, 128), Cout=128,
             residual=True, dtype=jnp.float32, atol=2e-2, rtol=2e-2),
        # bf16 streams, small HW -> batched grid steps, packed single-dot path
        dict(name="bf16-batched-concat", N=4, H=8, W=8, c_sizes=(16, 16), Cout=16,
             residual=True, dtype=jnp.bfloat16, atol=5e-2, rtol=5e-2),
    ]
    case_keys = jax.random.split(root_key, len(cases))
    for case_key, case in zip(case_keys, cases):
        _run_case(case_key, **case)

    print("KERNEL_OK")
</pallas_src>

<mosaic_0001>
module attributes {stable_mosaic.version = 11 : i64} {
  func.func @_root_kernel(%arg0: i32, %arg1: i32, %arg2: memref<1x4x256xf32, #tpu.memory_space<vmem>>, %arg3: memref<1x4x256xf32, #tpu.memory_space<vmem>>, %arg4: memref<4x16xf32, #tpu.memory_space<vmem>>, %arg5: memref<4x1xf32, #tpu.memory_space<vmem>>, %arg6: memref<1x4x256xf32, #tpu.memory_space<vmem>>, %arg7: memref<16x256xf32, #tpu.memory_space<vmem>>) attributes {dimension_semantics = [#tpu.dimension_semantics<parallel>, #tpu.dimension_semantics<parallel>], iteration_bounds = array<i64: 2, 1>, scalar_prefetch = 0 : i64, scratch_operands = 1 : i64, tpu.core_type = #tpu.core_type<tc>, window_params = [{transform_indices = @transform_0, window_bounds = array<i64: 1, 4, 256>}, {transform_indices = @transform_1, window_bounds = array<i64: 1, 4, 256>}, {pipeline_mode = #tpu.pipeline_mode<synchronous>, transform_indices = @transform_2, window_bounds = array<i64: 4, 16>}, {pipeline_mode = #tpu.pipeline_mode<synchronous>, transform_indices = @transform_3, window_bounds = array<i64: 4, 1>}, {transform_indices = @transform_4, window_bounds = array<i64: 1, 4, 256>}]} {
    %c0 = arith.constant 0 : index
    %c0_0 = arith.constant 0 : index
    %0 = vector.load %arg5[%c0, %c0_0] : memref<4x1xf32, #tpu.memory_space<vmem>>, vector<4x1xf32>
    %c0_1 = arith.constant 0 : index
    %c0_2 = arith.constant 0 : index
    %c0_3 = arith.constant 0 : index
    %1 = vector.load %arg2[%c0_1, %c0_2, %c0_3] : memref<1x4x256xf32, #tpu.memory_space<vmem>>, vector<1x4x256xf32>
    %2 = vector.shape_cast %1 : vector<1x4x256xf32> to vector<4x256xf32>
    %cst = arith.constant 0.000000e+00 : f32
    %3 = vector.broadcast %cst : f32 to vector<4x256xf32>
    %4 = tpu.concatenate %2, %3 in 0 : vector<4x256xf32>, vector<4x256xf32> -> vector<8x256xf32>
    %c0_4 = arith.constant 0 : index
    %c0_5 = arith.constant 0 : index
    %5 = vector.load %arg7[%c0_4, %c0_5] : memref<16x256xf32, #tpu.memory_space<vmem>>, vector<8x256xf32>
    tpu.vector_store %arg7[%c0_4, %c0_5], %4 {strides = array<i32>} : memref<16x256xf32, #tpu.memory_space<vmem>>, vector<8x256xf32>,
    %c0_6 = arith.constant 0 : index
    %c0_7 = arith.constant 0 : index
    %c0_8 = arith.constant 0 : index
    %6 = vector.load %arg3[%c0_6, %c0_7, %c0_8] : memref<1x4x256xf32, #tpu.memory_space<vmem>>, vector<1x4x256xf32>
    %7 = vector.shape_cast %6 : vector<1x4x256xf32> to vector<4x256xf32>
    %cst_9 = arith.constant 0.000000e+00 : f32
    %8 = vector.broadcast %cst_9 : f32 to vector<4x256xf32>
    %9 = tpu.concatenate %7, %8 in 0 : vector<4x256xf32>, vector<4x256xf32> -> vector<8x256xf32>
    %c8 = arith.constant 8 : index
    %c0_10 = arith.constant 0 : index
    %10 = vector.load %arg7[%c8, %c0_10] : memref<16x256xf32, #tpu.memory_space<vmem>>, vector<8x256xf32>
    tpu.vector_store %arg7[%c8, %c0_10], %9 {strides = array<i32>} : memref<16x256xf32, #tpu.memory_space<vmem>>, vector<8x256xf32>,
    %c0_11 = arith.constant 0 : index
    %c0_12 = arith.constant 0 : index
    %11 = vector.load %arg4[%c0_11, %c0_12] : memref<4x16xf32, #tpu.memory_space<vmem>>, vector<4x16xf32>
    %c0_13 = arith.constant 0 : index
    %c0_14 = arith.constant 0 : index
    %12 = vector.load %arg7[%c0_13, %c0_14] : memref<16x256xf32, #tpu.memory_space<vmem>>, vector<16x256xf32>
    %cst_15 = arith.constant dense<0.000000e+00> : vector<4x256xf32>
    %13 = tpu.matmul %11, %12, %cst_15 {dimension_numbers = #tpu.dot_dimension_numbers<[1], [0], [0], [1], [0, 0, 1, 1], [], []>} : vector<4x16xf32>, vector<16x256xf32>, vector<4x256xf32> -> vector<4x256xf32>
    %14 = vector.broadcast %0 : vector<4x1xf32> to vector<4x256xf32>
    %15 = arith.addf %13, %14 : vector<4x256xf32>
    %c0_16 = arith.constant 0 : index
    %c0_17 = arith.constant 0 : index
    %c0_18 = arith.constant 0 : index
    %16 = vector.load %arg2[%c0_16, %c0_17, %c0_18] : memref<1x4x256xf32, #tpu.memory_space<vmem>>, vector<1x4x256xf32>
    %17 = vector.shape_cast %16 : vector<1x4x256xf32> to vector<4x256xf32>
    %18 = arith.addf %15, %17 : vector<4x256xf32>
    %cst_19 = arith.constant 0.000000e+00 : f32
    %19 = vector.broadcast %cst_19 : f32 to vector<4x256xf32>
    %20 = arith.maximumf %18, %19 : vector<4x256xf32>
    %c0_20 = arith.constant 0 : index
    %c0_21 = arith.constant 0 : index
    %c0_22 = arith.constant 0 : index
    %21 = vector.load %arg6[%c0_20, %c0_21, %c0_22] : memref<1x4x256xf32, #tpu.memory_space<vmem>>, vector<1x4x256xf32>
    %22 = vector.shape_cast %21 : vector<1x4x256xf32> to vector<4x256xf32>
    %23 = vector.shape_cast %20 : vector<4x256xf32> to vector<1x4x256xf32>
    tpu.vector_store %arg6[%c0_20, %c0_21, %c0_22], %23 {strides = array<i32>} : memref<1x4x256xf32, #tpu.memory_space<vmem>>, vector<1x4x256xf32>,
    return
  }
  func.func @transform_0(%arg0: i32, %arg1: i32) -> (i32, i32, i32) {
    %c0_i32 = arith.constant 0 : i32
    %c0_i32_0 = arith.constant 0 : i32
    return %arg0, %c0_i32, %arg1 : i32, i32, i32
  }
  func.func @transform_1(%arg0: i32, %arg1: i32) -> (i32, i32, i32) {
    %c0_i32 = arith.constant 0 : i32
    %c0_i32_0 = arith.constant 0 : i32
    return %arg0, %c0_i32, %arg1 : i32, i32, i32
  }
  func.func @transform_2(%arg0: i32, %arg1: i32) -> (i32, i32) {
    %c0_i32 = arith.constant 0 : i32
    %c0_i32_0 = arith.constant 0 : i32
    %c0_i32_1 = arith.constant 0 : i32
    return %c0_i32, %c0_i32_0 : i32, i32
  }
  func.func @transform_3(%arg0: i32, %arg1: i32) -> (i32, i32) {
    %c0_i32 = arith.constant 0 : i32
    %c0_i32_0 = arith.constant 0 : i32
    %c0_i32_1 = arith.constant 0 : i32
    return %c0_i32, %c0_i32_0 : i32, i32
  }
  func.func @transform_4(%arg0: i32, %arg1: i32) -> (i32, i32, i32) {
    %c0_i32 = arith.constant 0 : i32
    %c0_i32_0 = arith.constant 0 : i32
    return %arg0, %c0_i32, %arg1 : i32, i32, i32
  }
}

module attributes {stable_mosaic.version = 11 : i64} {
  func.func @_root_kernel(%arg0: i32, %arg1: i32, %arg2: memref<1x4x256xf32, #tpu.memory_space<vmem>>, %arg3: memref<1x4x256xf32, #tpu.memory_space<vmem>>, %arg4: memref<4x16xf32, #tpu.memory_space<vmem>>, %arg5: memref<4x1xf32, #tpu.memory_space<vmem>>, %arg6: memref<1x4x256xf32, #tpu.memory_space<vmem>>, %arg7: memref<16x256xf32, #tpu.memory_space<vmem>>) attributes {dimension_semantics = [#tpu.dimension_semantics<parallel>, #tpu.dimension_semantics<parallel>], iteration_bounds = array<i64: 2, 1>, scalar_prefetch = 0 : i64, scratch_operands = 1 : i64, tpu.core_type = #tpu.core_type<tc>, window_params = [{transform_indices = @transform_0, window_bounds = array<i64: 1, 4, 256>}, {transform_indices = @transform_1, window_bounds = array<i64: 1, 4, 256>}, {pipeline_mode = #tpu.pipeline_mode<synchronous>, transform_indices = @transform_2, window_bounds = array<i64: 4, 16>}, {pipeline_mode = #tpu.pipeline_mode<synchronous>, transform_indices = @transform_3, window_bounds = array<i64: 4, 1>}, {transform_indices = @transform_4, window_bounds = array<i64: 1, 4, 256>}]} {
    %c0 = arith.constant 0 : index
    %c0_0 = arith.constant 0 : index
    %0 = vector.load %arg5[%c0, %c0_0] : memref<4x1xf32, #tpu.memory_space<vmem>>, vector<4x1xf32>
    %c0_1 = arith.constant 0 : index
    %c0_2 = arith.constant 0 : index
    %c0_3 = arith.constant 0 : index
    %1 = vector.load %arg2[%c0_1, %c0_2, %c0_3] : memref<1x4x256xf32, #tpu.memory_space<vmem>>, vector<1x4x256xf32>
    %2 = vector.shape_cast %1 : vector<1x4x256xf32> to vector<4x256xf32>
    %cst = arith.constant 0.000000e+00 : f32
    %3 = vector.broadcast %cst : f32 to vector<4x256xf32>
    %4 = tpu.concatenate %2, %3 in 0 : vector<4x256xf32>, vector<4x256xf32> -> vector<8x256xf32>
    %c0_4 = arith.constant 0 : index
    %c0_5 = arith.constant 0 : index
    %5 = vector.load %arg7[%c0_4, %c0_5] : memref<16x256xf32, #tpu.memory_space<vmem>>, vector<8x256xf32>
    tpu.vector_store %arg7[%c0_4, %c0_5], %4 {strides = array<i32>} : memref<16x256xf32, #tpu.memory_space<vmem>>, vector<8x256xf32>,
    %c0_6 = arith.constant 0 : index
    %c0_7 = arith.constant 0 : index
    %c0_8 = arith.constant 0 : index
    %6 = vector.load %arg3[%c0_6, %c0_7, %c0_8] : memref<1x4x256xf32, #tpu.memory_space<vmem>>, vector<1x4x256xf32>
    %7 = vector.shape_cast %6 : vector<1x4x256xf32> to vector<4x256xf32>
    %cst_9 = arith.constant 0.000000e+00 : f32
    %8 = vector.broadcast %cst_9 : f32 to vector<4x256xf32>
    %9 = tpu.concatenate %7, %8 in 0 : vector<4x256xf32>, vector<4x256xf32> -> vector<8x256xf32>
    %c8 = arith.constant 8 : index
    %c0_10 = arith.constant 0 : index
    %10 = vector.load %arg7[%c8, %c0_10] : memref<16x256xf32, #tpu.memory_space<vmem>>, vector<8x256xf32>
    tpu.vector_store %arg7[%c8, %c0_10], %9 {strides = array<i32>} : memref<16x256xf32, #tpu.memory_space<vmem>>, vector<8x256xf32>,
    %c0_11 = arith.constant 0 : index
    %c0_12 = arith.constant 0 : index
    %11 = vector.load %arg4[%c0_11, %c0_12] : memref<4x16xf32, #tpu.memory_space<vmem>>, vector<4x16xf32>
    %c0_13 = arith.constant 0 : index
    %c0_14 = arith.constant 0 : index
    %12 = vector.load %arg7[%c0_13, %c0_14] : memref<16x256xf32, #tpu.memory_space<vmem>>, vector<16x256xf32>
    %cst_15 = arith.constant dense<0.000000e+00> : vector<4x256xf32>
    %13 = tpu.matmul %11, %12, %cst_15 {dimension_numbers = #tpu.dot_dimension_numbers<[1], [0], [0], [1], [0, 0, 1, 1], [], []>} : vector<4x16xf32>, vector<16x256xf32>, vector<4x256xf32> -> vector<4x256xf32>
    %14 = vector.broadcast %0 : vector<4x1xf32> to vector<4x256xf32>
    %15 = arith.addf %13, %14 : vector<4x256xf32>
    %c0_16 = arith.constant 0 : index
    %c0_17 = arith.constant 0 : index
    %c0_18 = arith.constant 0 : index
    %16 = vector.load %arg2[%c0_16, %c0_17, %c0_18] : memref<1x4x256xf32, #tpu.memory_space<vmem>>, vector<1x4x256xf32>
    %17 = vector.shape_cast %16 : vector<1x4x256xf32> to vector<4x256xf32>
    %18 = arith.addf %15, %17 : vector<4x256xf32>
    %cst_19 = arith.constant 0.000000e+00 : f32
    %19 = vector.broadcast %cst_19 : f32 to vector<4x256xf32>
    %20 = arith.maximumf %18, %19 : vector<4x256xf32>
    %c0_20 = arith.constant 0 : index
    %c0_21 = arith.constant 0 : index
    %c0_22 = arith.constant 0 : index
    %21 = vector.load %arg6[%c0_20, %c0_21, %c0_22] : memref<1x4x256xf32, #tpu.memory_space<vmem>>, vector<1x4x256xf32>
    %22 = vector.shape_cast %21 : vector<1x4x256xf32> to vector<4x256xf32>
    %23 = vector.shape_cast %20 : vector<4x256xf32> to vector<1x4x256xf32>
    tpu.vector_store %arg6[%c0_20, %c0_21, %c0_22], %23 {strides = array<i32>} : memref<1x4x256xf32, #tpu.memory_space<vmem>>, vector<1x4x256xf32>,
    return
  }
  func.func @transform_0(%arg0: i32, %arg1: i32) -> (i32, i32, i32) {
    %c0_i32 = arith.constant 0 : i32
    %c0_i32_0 = arith.constant 0 : i32
    return %arg0, %c0_i32, %arg1 : i32, i32, i32
  }
  func.func @transform_1(%arg0: i32, %arg1: i32) -> (i32, i32, i32) {
    %c0_i32 = arith.constant 0 : i32
    %c0_i32_0 = arith.constant 0 : i32
    return %arg0, %c0_i32, %arg1 : i32, i32, i32
  }
  func.func @transform_2(%arg0: i32, %arg1: i32) -> (i32, i32) {
    %c0_i32 = arith.constant 0 : i32
    %c0_i32_0 = arith.constant 0 : i32
    %c0_i32_1 = arith.constant 0 : i32
    return %c0_i32, %c0_i32_0 : i32, i32
  }
  func.func @transform_3(%arg0: i32, %arg1: i32) -> (i32, i32) {
    %c0_i32 = arith.constant 0 : i32
    %c0_i32_0 = arith.constant 0 : i32
    %c0_i32_1 = arith.constant 0 : i32
    return %c0_i32, %c0_i32_0 : i32, i32
  }
  func.func @transform_4(%arg0: i32, %arg1: i32) -> (i32, i32, i32) {
    %c0_i32 = arith.constant 0 : i32
    %c0_i32_0 = arith.constant 0 : i32
    return %arg0, %c0_i32, %arg1 : i32, i32, i32
  }
}

</mosaic_0001>

<llo_original>
// kernel: tpu_custom_call.1
$region0: #{tpu_custom_call.1}
  #allocation0 [shape = 'u32[]', space=smem, size = 0x4, offset = 0x4, fixed_abs, tag = 'smem constant byte address 0x4 - core index']
  #allocation1 [shape = 'u32[144,128]{1,0:T(1,128)}', space=vmem, size = 0x12000, scoped, tag = 'internal scratch']
  #allocation2 [shape = 'f32[16,256]{1,0:T(8,128)}', space=vmem, size = 0x4000, scoped, tag = 'scratch operand']
  %s0 = inlined_call_operand.hbm [shape: f32[2,4,256], index: 0, kind: input, shape index: {}]
  %s1 = inlined_call_operand.hbm [shape: f32[2,4,256], index: 1, kind: input, shape index: {}]
  %s2 = inlined_call_operand.vmem [shape: f32[4,16], index: 2, kind: input, shape index: {}]
  %s3 = inlined_call_operand.vmem [shape: f32[4,1], index: 3, kind: input, shape index: {}]
  %s4 = inlined_call_operand.hbm [shape: f32[2,4,256], index: 4, kind: output, shape index: {}]
  %s5 = sld [smem:[#allocation0]]
  $region57: #{tpu_custom_call.1} parent=0
    _
  %s7 = ssub.s32 1, %s5
  %s8 = scalar_select 0, %s7, %s5
  $region1: #{tpu_custom_call.1} parent=0
    #allocation3 [shape = 'u8[8192]{0}', space=vmem, size = 0x2000, scoped, tag = 'input window, operand 0']
    #allocation4 [shape = 's32[2]{0}', space=sflag, size = 0x8, scoped, tag = 'scoped memory for tpu_custom_call.1']
    #allocation5 [shape = 's32[2]{0}', space=sflag, size = 0x8, scoped, tag = 'scoped memory for tpu_custom_call.1']
    #allocation6 [shape = 'u8[8192]{0}', space=vmem, size = 0x2000, scoped, tag = 'input window, operand 1']
    #allocation7 [shape = 's32[2]{0}', space=sflag, size = 0x8, scoped, tag = 'scoped memory for tpu_custom_call.1']
    #allocation8 [shape = 'u8[8192]{0}', space=vmem, size = 0x2000, scoped, tag = 'output window, operand 0']
    %9 = vsyncpa [#allocation4], 0
    %s10 = scalar_lea.sflag [#allocation4], 1
    %11 = vsyncpa %s10, 0
    %12 = vsyncpa [#allocation7], 0
    %s13 = scalar_lea.sflag [#allocation7], 1
    %14 = vsyncpa %s13, 0
    %15 = vsyncpa [#allocation5], 0
    %s16 = scalar_lea.sflag [#allocation5], 1
    %17 = vsyncpa %s16, 0
    loop: start=0, step=1, limit=4
    $region2: #{tpu_custom_call.1} parent=1 // loop_pre_header
      _
    $region3: #{tpu_custom_call.1} parent=1 // loop_header
      %s19 = sphi 0, %s23
      %p20 = scmp.ge.s32.totalorder %s19, 4
      %s26 = sphi 0, %s38
      %s27 = sphi 0, %s34
      %s28 = sphi 0, %s26
      %s29 = sphi 0, %s27
      %s30 = sphi 0, %s28
      %s31 = sphi 0, %s29
      %s43 = sphi 0, %s45
      %s46 = sphi 0, %s43
      %s47 = sphi 0, %s46
      %s63 = sphi 0, %s47
      %s71 = sphi 0, %s73
      %s74 = sphi 0, %s71
      %s75 = sphi 0, %s74
      %s91 = sphi 0, %s75
      %s95 = sphi 0, %s95
      %s97 = sphi 0, %s95
      %s98 = sphi 0, %s97
      %s112 = sphi 0, %s98
      %s116 = sphi 0, %s116
      %s118 = sphi 0, %s116
      %s119 = sphi 0, %s118
      %s133 = sphi 0, %s119
      %s141 = sphi 0, %s143
      %s144 = sphi 0, %s141
      %s145 = sphi 0, %s144
      %s161 = sphi 0, %s145
    $region4: #{tpu_custom_call.1} parent=1 // loop_header_branch
      %22 = sbr.rel (%p20) target = $region8
    $region5: #{tpu_custom_call.1} parent=1 // loop_body
      %s24 = ssub.s32 %s19, 1
      %s25 = ssub.s32 %s19, 2
      %s32 = sadd.s32 1, %s27
      %p33 = scmp.ge.s32.totalorder %s32, 1
      %s34 = scalar_select %p33, 0, %s32
      %s35 = sadd.s32 1, %s26
      %s36 = scalar_select %p33, %s35, %s26
      %p37 = scmp.ge.s32.totalorder %s36, 2
      %s38 = scalar_select %p37, 0, %s36
      %s39 = ssub.s32 %s26, %s38
      %s40 = ssub.s32 %s27, %s34
      %s41 = sor.u32 %s39, %s40
      %p42 = scmp.eq.s32.totalorder %s41, 0
      %s44 = sadd.s32 %s43, 1
      %s45 = scalar_select %p42, %s43, %s44
      %p48 = pneg %p42
      %p49 = scmp.eq.s32.totalorder %s19, 1
      %p50 = por %p48, %p49
      %p51 = scmp.ne.s32.totalorder %s43, %s46
      %p52 = scmp.eq.s32.totalorder %s19, 0
      %p53 = por %p51, %p52
      %p54 = scmp.ne.s32.totalorder %s43, %s46
      %p55 = scmp.eq.s32.totalorder %s24, 1
      %p56 = por %p54, %p55
      %p57 = scmp.ne.s32.totalorder %s46, %s47
      %p58 = scmp.eq.s32.totalorder %s24, 0
      %p59 = por %p57, %p58
      %p60 = scmp.ne.s32.totalorder %s46, %s47
      %p61 = scmp.eq.s32.totalorder %s25, 1
      %p62 = por %p60, %p61
      %p64 = scmp.ne.s32.totalorder %s47, %s63
      %p65 = scmp.eq.s32.totalorder %s25, 0
      %p66 = por %p64, %p65
      %s67 = ssub.s32 %s26, %s38
      %s68 = ssub.s32 %s27, %s34
      %s69 = sor.u32 %s67, %s68
      %p70 = scmp.eq.s32.totalorder %s69, 0
      %s72 = sadd.s32 %s71, 1
      %s73 = scalar_select %p70, %s71, %s72
      %p76 = pneg %p70
      %p77 = scmp.eq.s32.totalorder %s19, 1
      %p78 = por %p76, %p77
      %p79 = scmp.ne.s32.totalorder %s71, %s74
      %p80 = scmp.eq.s32.totalorder %s19, 0
      %p81 = por %p79, %p80
      %p82 = scmp.ne.s32.totalorder %s71, %s74
      %p83 = scmp.eq.s32.totalorder %s24, 1
      %p84 = por %p82, %p83
      %p85 = scmp.ne.s32.totalorder %s74, %s75
      %p86 = scmp.eq.s32.totalorder %s24, 0
      %p87 = por %p85, %p86
      %p88 = scmp.ne.s32.totalorder %s74, %s75
      %p89 = scmp.eq.s32.totalorder %s25, 1
      %p90 = por %p88, %p89
      %p92 = scmp.ne.s32.totalorder %s75, %s91
      %p93 = scmp.eq.s32.totalorder %s25, 0
      %p94 = por %p92, %p93
      %s96 = sadd.s32 %s95, 1
      %p99 = scmp.eq.s32.totalorder %s19, 1
      %p100 = scmp.ne.s32.totalorder %s95, %s97
      %p101 = scmp.eq.s32.totalorder %s19, 0
      %p102 = por %p100, %p101
      %p103 = scmp.ne.s32.totalorder %s95, %s97
      %p104 = scmp.eq.s32.totalorder %s24, 1
      %p105 = por %p103, %p104
      %p106 = scmp.ne.s32.totalorder %s97, %s98
      %p107 = scmp.eq.s32.totalorder %s24, 0
      %p108 = por %p106, %p107
      %p109 = scmp.ne.s32.totalorder %s97, %s98
      %p110 = scmp.eq.s32.totalorder %s25, 1
      %p111 = por %p109, %p110
      %p113 = scmp.ne.s32.totalorder %s98, %s112
      %p114 = scmp.eq.s32.totalorder %s25, 0
      %p115 = por %p113, %p114
      %s117 = sadd.s32 %s116, 1
      %p120 = scmp.eq.s32.totalorder %s19, 1
      %p121 = scmp.ne.s32.totalorder %s116, %s118
      %p122 = scmp.eq.s32.totalorder %s19, 0
      %p123 = por %p121, %p122
      %p124 = scmp.ne.s32.totalorder %s116, %s118
      %p125 = scmp.eq.s32.totalorder %s24, 1
      %p126 = por %p124, %p125
      %p127 = scmp.ne.s32.totalorder %s118, %s119
      %p128 = scmp.eq.s32.totalorder %s24, 0
      %p129 = por %p127, %p128
      %p130 = scmp.ne.s32.totalorder %s118, %s119
      %p131 = scmp.eq.s32.totalorder %s25, 1
      %p132 = por %p130, %p131
      %p134 = scmp.ne.s32.totalorder %s119, %s133
      %p135 = scmp.eq.s32.totalorder %s25, 0
      %p136 = por %p134, %p135
      %s137 = ssub.s32 %s26, %s38
      %s138 = ssub.s32 %s27, %s34
      %s139 = sor.u32 %s137, %s138
      %p140 = scmp.eq.s32.totalorder %s139, 0
      %s142 = sadd.s32 %s141, 1
      %s143 = scalar_select %p140, %s141, %s142
      %p146 = pneg %p140
      %p147 = scmp.eq.s32.totalorder %s19, 1
      %p148 = por %p146, %p147
      %p149 = scmp.ne.s32.totalorder %s141, %s144
      %p150 = scmp.eq.s32.totalorder %s19, 0
      %p151 = por %p149, %p150
      %p152 = scmp.ne.s32.totalorder %s141, %s144
      %p153 = scmp.eq.s32.totalorder %s24, 1
      %p154 = por %p152, %p153
      %p155 = scmp.ne.s32.totalorder %s144, %s145
      %p156 = scmp.eq.s32.totalorder %s24, 0
      %p157 = por %p155, %p156
      %p158 = scmp.ne.s32.totalorder %s144, %s145
      %p159 = scmp.eq.s32.totalorder %s25, 1
      %p160 = por %p158, %p159
      %p162 = scmp.ne.s32.totalorder %s145, %s161
      %p163 = scmp.eq.s32.totalorder %s25, 0
      %p164 = por %p162, %p163
      %p165 = scmp.le.s32.totalorder 1, %s19
      %p166 = scmp.lt.s32.totalorder %s19, 3
      %p167 = pnand %p165, %p166
      %p168 = pneg %p167
      // Predicated region
      $region9: #{tpu_custom_call.1} parent=5 // pred_check
        _
      $region10: #{tpu_custom_call.1} parent=5 // pred_check_branch
        %170 = sbr.rel (%p167) target = $region12
      $region11: #{tpu_custom_call.1} parent=5 // pred_region
        %s171 = ssub.s32 %s19, 1
        // Predicated region
        $region13: #{tpu_custom_call.1} parent=11 // pred_check
          %p172 = pneg %p108
        $region14: #{tpu_custom_call.1} parent=11 // pred_check_branch
          %174 = sbr.rel (%p172) target = $region16
        $region15: #{tpu_custom_call.1} parent=11 // pred_region
          _
        $region16: #{tpu_custom_call.1} parent=11 // pred_fallthru
          _
        // Predicated region
        $region17: #{tpu_custom_call.1} parent=11 // pred_check
          %p175 = pneg %p129
        $region18: #{tpu_custom_call.1} parent=11 // pred_check_branch
          %177 = sbr.rel (%p175) target = $region20
        $region19: #{tpu_custom_call.1} parent=11 // pred_region
          _
        $region20: #{tpu_custom_call.1} parent=11 // pred_fallthru
          _
      $region12: #{tpu_custom_call.1} parent=5 // pred_fallthru
        _
      %p178 = scmp.lt.s32.totalorder %s19, 2
      // Predicated region
      $region21: #{tpu_custom_call.1} parent=5 // pred_check
        %p179 = pneg %p178
      $region22: #{tpu_custom_call.1} parent=5 // pred_check_branch
        %181 = sbr.rel (%p179) target = $region24
      $region23: #{tpu_custom_call.1} parent=5 // pred_region
        // Predicated region
        $region25: #{tpu_custom_call.1} parent=23 // pred_check
          %p182 = pneg %p53
        $region26: #{tpu_custom_call.1} parent=23 // pred_check_branch
          %184 = sbr.rel (%p182) target = $region28
        $region27: #{tpu_custom_call.1} parent=23 // pred_region
          %s185 = sand.u32 %s43, 1
          %s186 = scalar_lea.sflag [#allocation4], %s185
          %s187 = sand.u32 %s43, 1
          %s188 = smul.addr %s187, 8
          %s189 = scalar_lea.vmem [#allocation3], %s188
          %s190 = smul.u32 2, %s27
          %s192 = ssub.s32 128, 128
          %193 = vsyncadd %s186, %s192
          %s194 = smul.addr %s26, 2
          %s195 = sadd.s32 %s190, %s194
          %s196 = smul.addr %s195, 64
          %s197 = scalar_lea.hbm %s0, %s196
          %s199 = sshll.u32 %s189, 4
          %s200 = int_to_ptr.vmem [resolvable:$true] %s199
          %202 = dma.hbm_to_vmem [thread:$0]  %s197, 128, %s200, %s186
        $region28: #{tpu_custom_call.1} parent=23 // pred_fallthru
          _
        // Predicated region
        $region29: #{tpu_custom_call.1} parent=23 // pred_check
          %p203 = pneg %p81
        $region30: #{tpu_custom_call.1} parent=23 // pred_check_branch
          %205 = sbr.rel (%p203) target = $region32
        $region31: #{tpu_custom_call.1} parent=23 // pred_region
          %s206 = sand.u32 %s71, 1
          %s207 = scalar_lea.sflag [#allocation7], %s206
          %s208 = sand.u32 %s71, 1
          %s209 = smul.addr %s208, 8
          %s210 = scalar_lea.vmem [#allocation6], %s209
          %s211 = smul.u32 2, %s27
          %s213 = ssub.s32 128, 128
          %214 = vsyncadd %s207, %s213
          %s215 = smul.addr %s26, 2
          %s216 = sadd.s32 %s211, %s215
          %s217 = smul.addr %s216, 64
          %s218 = scalar_lea.hbm %s1, %s217
          %s220 = sshll.u32 %s210, 4
          %s221 = int_to_ptr.vmem [resolvable:$true] %s220
          %223 = dma.hbm_to_vmem [thread:$0]  %s218, 128, %s221, %s207
        $region32: #{tpu_custom_call.1} parent=23 // pred_fallthru
          _
      $region24: #{tpu_custom_call.1} parent=5 // pred_fallthru
        _
      %p224 = scmp.le.s32.totalorder 1, %s19
      %p225 = scmp.lt.s32.totalorder %s19, 3
      %p226 = pnand %p224, %p225
      %p227 = pneg %p226
      // Predicated region
      $region33: #{tpu_custom_call.1} parent=5 // pred_check
        _
      $region34: #{tpu_custom_call.1} parent=5 // pred_check_branch
        %229 = sbr.rel (%p226) target = $region36
      $region35: #{tpu_custom_call.1} parent=5 // pred_region
        %s230 = ssub.s32 %s19, 1
        %s231 = sand.u32 %s46, 1
        %s232 = scalar_lea.sflag [#allocation4], %s231
        %s233 = sand.u32 %s46, 1
        %s234 = smul.addr %s233, 8
        %s235 = scalar_lea.vmem [#allocation3], %s234
        // Predicated region
        $region37: #{tpu_custom_call.1} parent=35 // pred_check
          %p236 = pneg %p59
        $region38: #{tpu_custom_call.1} parent=35 // pred_check_branch
          %238 = sbr.rel (%p236) target = $region40
        $region39: #{tpu_custom_call.1} parent=35 // pred_region
          %239 = dma.done %s232, 128
        $region40: #{tpu_custom_call.1} parent=35 // pred_fallthru
          _
        %s240 = sand.u32 %s74, 1
        %s241 = scalar_lea.sflag [#allocation7], %s240
        %s242 = sand.u32 %s74, 1
        %s243 = smul.addr %s242, 8
        %s244 = scalar_lea.vmem [#allocation6], %s243
        // Predicated region
        $region41: #{tpu_custom_call.1} parent=35 // pred_check
          %p245 = pneg %p87
        $region42: #{tpu_custom_call.1} parent=35 // pred_check_branch
          %247 = sbr.rel (%p245) target = $region44
        $region43: #{tpu_custom_call.1} parent=35 // pred_region
          %248 = dma.done %s241, 128
        $region44: #{tpu_custom_call.1} parent=35 // pred_fallthru
          _
        %s249 = sand.u32 %s46, 1
        %s250 = scalar_lea.sflag [#allocation4], %s249
        %s251 = sand.u32 %s46, 1
        %s252 = smul.addr %s251, 8
        %s253 = scalar_lea.vmem [#allocation3], %s252
        %p254 = pneg %p59
        %p255 = pneg %p56
        %s256 = sand.u32 %s74, 1
        %s257 = scalar_lea.sflag [#allocation7], %s256
        %s258 = sand.u32 %s74, 1
        %s259 = smul.addr %s258, 8
        %s260 = scalar_lea.vmem [#allocation6], %s259
        %p261 = pneg %p87
        %p262 = pneg %p84
        %p263 = pneg %p108
        %p264 = pneg %p105
        %p265 = pneg %p129
        %p266 = pneg %p126
        %p267 = pneg %p157
        %p268 = pneg %p154
        %s269 = sand.u32 %s144, 1
        %s270 = scalar_lea.sflag [#allocation5], %s269
        %s271 = sand.u32 %s144, 1
        %s272 = smul.addr %s271, 8
        %s273 = scalar_lea.vmem [#allocation8], %s272
        %s274 = smul.u32 2, %s29
        %s275 = smul.u32 2, %s29
        %s276 = smul.u32 2, %s29
        %v277 = vld [vmem:[%s3] sm:$0xf]
        %v278 = vld [vmem:[%s235] sm:$0xff]
        %v280 = vcombine.high %v278, %v278
        %vm282 = vcmask 1043456
        %v283 = vsel %vm282, %v278, 0.0
        %v284 = vsel %vm282, %v280, 0.0
        %285 = vst [vmem:[#allocation2] sm:$0xff] %v283
        %286 = vst [vmem:[#allocation2 + $0x8] sm:$0xff] %v284
        %v287 = vld [vmem:[%s244] sm:$0xff]
        %v289 = vcombine.high %v287, %v287
        %v291 = vsel %vm282, %v287, 0.0
        %v292 = vsel %vm282, %v289, 0.0
        %293 = vst [vmem:[#allocation2 + $0x10] sm:$0xff] %v291
        %294 = vst [vmem:[#allocation2 + $0x18] sm:$0xff] %v292
        %v295 = vld [vmem:[%s2] sm:$0xf]
        %v296 = vld [vmem:[#allocation2] sm:$0xff]
        %v297 = vld [vmem:[#allocation2 + $0x8] sm:$0xff]
        %v298 = vld [vmem:[#allocation2 + $0x10] sm:$0xff]
        %v299 = vld [vmem:[#allocation2 + $0x18] sm:$0xff]
        %301 = vset.pattern.permute.xlu0 0
        %302 = vperm.xlu0 %301, %v277
        %v303 = vpop.permute.xlu0 %302
        %vm305 = vcmask 130048
        %v307 = vsel %vm305, %v295, 0
        %309 = vmatprep.subr.mxu0 0.0
        %310 = vmatpush1.msra.mxu0 0.0
        %311 = vmatprep.subr.mxu0 0.0
        %312 = vmatpush1.msra.mxu0 0.0
        %313 = vmatprep.subr.mxu0 0.0
        %314 = vmatpush1.msra.mxu0 0.0
        %315 = vmatprep.subr.mxu0 0.0
        %316 = vmatpush1.msra.mxu0 0.0
        %317 = vmatprep.subr.mxu0 0.0
        %318 = vmatpush1.msra.mxu0 0.0
        %319 = vmatprep.subr.mxu0 0.0
        %320 = vmatpush1.msra.mxu0 0.0
        %321 = vmatprep.subr.mxu0 0.0
        %322 = vmatpush1.msra.mxu0 0.0
        %323 = vmatprep.subr.mxu0 0.0
        %324 = vmatpush1.msra.mxu0 0.0
        %325 = vmatprep.subr.mxu0 0.0
        %326 = vmatpush1.msra.mxu0 0.0
        %327 = vmatprep.subr.mxu0 0.0
        %328 = vmatpush1.msra.mxu0 0.0
        %329 = vmatprep.subr.mxu0 0.0
        %330 = vmatpush1.msra.mxu0 0.0
        %331 = vmatprep.subr.mxu0 0.0
        %332 = vmatpush1.msra.mxu0 0.0
        %333 = vmatprep.subr.mxu0 0.0
        %334 = vmatpush1.msra.mxu0 0.0
        %335 = vmatprep.subr.mxu0 0.0
        %336 = vmatpush1.msra.mxu0 0.0
        %337 = vmatprep.subr.mxu0 %v299
        %338 = vmatpush1.msra.mxu0 %v298
        %339 = vmatprep.subr.mxu0 %v297
        %340 = vmatpush1.msra.mxu0 %v296
        %341 = vmatprep.subr.mxu0 0.0
        %342 = vmatpush2.msra.mxu0 0.0
        %343 = vmatprep.subr.mxu0 0.0
        %344 = vmatpush2.msra.mxu0 0.0
        %345 = vmatprep.subr.mxu0 0.0
        %346 = vmatpush2.msra.mxu0 0.0
        %347 = vmatprep.subr.mxu0 0.0
        %348 = vmatpush2.msra.mxu0 0.0
        %349 = vmatprep.subr.mxu0 0.0
        %350 = vmatpush2.msra.mxu0 0.0
        %351 = vmatprep.subr.mxu0 0.0
        %352 = vmatpush2.msra.mxu0 0.0
        %353 = vmatprep.subr.mxu0 0.0
        %354 = vmatpush2.msra.mxu0 0.0
        %355 = vmatprep.subr.mxu0 0.0
        %356 = vmatpush2.msra.mxu0 0.0
        %357 = vmatprep.subr.mxu0 0.0
        %358 = vmatpush2.msra.mxu0 0.0
        %359 = vmatprep.subr.mxu0 0.0
        %360 = vmatpush2.msra.mxu0 0.0
        %361 = vmatprep.subr.mxu0 0.0
        %362 = vmatpush2.msra.mxu0 0.0
        %363 = vmatprep.subr.mxu0 0.0
        %364 = vmatpush2.msra.mxu0 0.0
        %365 = vmatprep.subr.mxu0 0.0
        %366 = vmatpush2.msra.mxu0 0.0
        %367 = vmatprep.subr.mxu0 0.0
        %368 = vmatpush2.msra.mxu0 0.0
        %369 = vmatprep.subr.mxu0 0.0
        %370 = vmatpush2.msra.mxu0 0.0
        %371 = vmatprep.subr.mxu0 0.0
        %372 = vmatpush2.msra.mxu0 0.0
        %373 = vmatprep.mubr.f32.mxu0 0.0
        %374 = vmatmul.mubr.f32.gmra.mxu0 %v307
        %v375 = vpop.f32.mrf.mxu0
        %v376 = vadd.f32 %v303, %v375
        %v377 = vpop.f32.mrf.mxu0
        %v378 = vadd.f32 %v303, %v377
        %379 = vdwg.mxu0
        %v380 = vld [vmem:[%s235] sm:$0xff]
        %v382 = vcombine.high %v380, %v380
        %v384 = vadd.f32 %v376, %v380
        %v385 = vadd.f32 %v378, %v382
        %v386 = vmax.f32 %v384, 0.0
        %v387 = vmax.f32 %v385, 0.0
        %v390 = vcombine.low %v386, %v387
        %392 = vst [vmem:[%s273] sm:$0xff] %v390
        %s393 = sand.u32 %s144, 1
        %s394 = scalar_lea.sflag [#allocation5], %s393
        %s395 = sand.u32 %s144, 1
        %s396 = smul.addr %s395, 8
        %s397 = scalar_lea.vmem [#allocation8], %s396
        // Predicated region
        $region45: #{tpu_custom_call.1} parent=35 // pred_check
          %p398 = pneg %p154
        $region46: #{tpu_custom_call.1} parent=35 // pred_check_branch
          %400 = sbr.rel (%p398) target = $region48
        $region47: #{tpu_custom_call.1} parent=35 // pred_region
          %s401 = smul.u32 2, %s29
          %s403 = ssub.s32 128, 128
          %404 = vsyncadd %s394, %s403
          %s405 = smul.addr %s28, 2
          %s406 = sadd.s32 %s401, %s405
          %s407 = smul.addr %s406, 64
          %s408 = scalar_lea.hbm %s4, %s407
          %s410 = sshll.u32 %s397, 4
          %s411 = int_to_ptr.vmem [resolvable:$true] %s410
          %413 = dma.vmem_to_hbm [thread:$0]  %s411, 128, %s408, %s394
        $region48: #{tpu_custom_call.1} parent=35 // pred_fallthru
          _
      $region36: #{tpu_custom_call.1} parent=5 // pred_fallthru
        _
      %p414 = scmp.le.s32.totalorder 2, %s19
      // Predicated region
      $region49: #{tpu_custom_call.1} parent=5 // pred_check
        %p415 = pneg %p414
      $region50: #{tpu_custom_call.1} parent=5 // pred_check_branch
        %417 = sbr.rel (%p415) target = $region52
      $region51: #{tpu_custom_call.1} parent=5 // pred_region
        %s418 = ssub.s32 %s19, 2
        // Predicated region
        $region53: #{tpu_custom_call.1} parent=51 // pred_check
          %p419 = pneg %p160
        $region54: #{tpu_custom_call.1} parent=51 // pred_check_branch
          %421 = sbr.rel (%p419) target = $region56
        $region55: #{tpu_custom_call.1} parent=51 // pred_region
          %s422 = sand.u32 %s145, 1
          %s423 = scalar_lea.sflag [#allocation5], %s422
          %s424 = sand.u32 %s145, 1
          %s425 = smul.addr %s424, 8
          %s426 = scalar_lea.vmem [#allocation8], %s425
          %427 = dma.done %s423, 128
        $region56: #{tpu_custom_call.1} parent=51 // pred_fallthru
          _
      $region52: #{tpu_custom_call.1} parent=5 // pred_fallthru
        _
    $region6: #{tpu_custom_call.1} parent=1 // loop_footer
      %s23 = sadd.s32 1, %s19
    $region7: #{tpu_custom_call.1} parent=1 // loop_footer_branch
      %18 = sbr.rel target = $region3
    $region8: #{tpu_custom_call.1} parent=1 // loop_exit
      _
    %428 = vsyncpa [#allocation4], 1
    %s429 = scalar_lea.sflag [#allocation4], 1
    %430 = vsyncpa %s429, 1
    %431 = vsyncpa [#allocation7], 1
    %s432 = scalar_lea.sflag [#allocation7], 1
    %433 = vsyncpa %s432, 1
    %434 = vsyncpa [#allocation5], 1
    %s435 = scalar_lea.sflag [#allocation5], 1
    %436 = vsyncpa %s435, 1

// kernel: tpu_custom_call.1
$region0: #{tpu_custom_call.1}
  #allocation0 [shape = 'u32[]', space=smem, size = 0x4, offset = 0x4, fixed_abs, tag = 'smem constant byte address 0x4 - core index']
  #allocation1 [shape = 'u32[144,128]{1,0:T(1,128)}', space=vmem, size = 0x12000, scoped, tag = 'internal scratch']
  #allocation2 [shape = 'f32[16,256]{1,0:T(8,128)}', space=vmem, size = 0x4000, scoped, tag = 'scratch operand']
  %s0 = inlined_call_operand.hbm [shape: f32[2,4,256], index: 0, kind: input, shape index: {}]
  %s1 = inlined_call_operand.hbm [shape: f32[2,4,256], index: 1, kind: input, shape index: {}]
  %s2 = inlined_call_operand.vmem [shape: f32[4,16], index: 2, kind: input, shape index: {}]
  %s3 = inlined_call_operand.vmem [shape: f32[4,1], index: 3, kind: input, shape index: {}]
  %s4 = inlined_call_operand.hbm [shape: f32[2,4,256], index: 4, kind: output, shape index: {}]
  %s5 = sld [smem:[#allocation0]]
  $region57: #{tpu_custom_call.1} parent=0
    _
  %s7 = ssub.s32 1, %s5
  %s8 = scalar_select 0, %s7, %s5
  $region1: #{tpu_custom_call.1} parent=0
    #allocation3 [shape = 'u8[8192]{0}', space=vmem, size = 0x2000, scoped, tag = 'input window, operand 0']
    #allocation4 [shape = 's32[2]{0}', space=sflag, size = 0x8, scoped, tag = 'scoped memory for tpu_custom_call.1']
    #allocation5 [shape = 's32[2]{0}', space=sflag, size = 0x8, scoped, tag = 'scoped memory for tpu_custom_call.1']
    #allocation6 [shape = 'u8[8192]{0}', space=vmem, size = 0x2000, scoped, tag = 'input window, operand 1']
    #allocation7 [shape = 's32[2]{0}', space=sflag, size = 0x8, scoped, tag = 'scoped memory for tpu_custom_call.1']
    #allocation8 [shape = 'u8[8192]{0}', space=vmem, size = 0x2000, scoped, tag = 'output window, operand 0']
    %9 = vsyncpa [#allocation4], 0
    %s10 = scalar_lea.sflag [#allocation4], 1
    %11 = vsyncpa %s10, 0
    %12 = vsyncpa [#allocation7], 0
    %s13 = scalar_lea.sflag [#allocation7], 1
    %14 = vsyncpa %s13, 0
    %15 = vsyncpa [#allocation5], 0
    %s16 = scalar_lea.sflag [#allocation5], 1
    %17 = vsyncpa %s16, 0
    loop: start=0, step=1, limit=4
    $region2: #{tpu_custom_call.1} parent=1 // loop_pre_header
      _
    $region3: #{tpu_custom_call.1} parent=1 // loop_header
      %s19 = sphi 0, %s23
      %p20 = scmp.ge.s32.totalorder %s19, 4
      %s26 = sphi 0, %s38
      %s27 = sphi 0, %s34
      %s28 = sphi 0, %s26
      %s29 = sphi 0, %s27
      %s30 = sphi 0, %s28
      %s31 = sphi 0, %s29
      %s43 = sphi 0, %s45
      %s46 = sphi 0, %s43
      %s47 = sphi 0, %s46
      %s63 = sphi 0, %s47
      %s71 = sphi 0, %s73
      %s74 = sphi 0, %s71
      %s75 = sphi 0, %s74
      %s91 = sphi 0, %s75
      %s95 = sphi 0, %s95
      %s97 = sphi 0, %s95
      %s98 = sphi 0, %s97
      %s112 = sphi 0, %s98
      %s116 = sphi 0, %s116
      %s118 = sphi 0, %s116
      %s119 = sphi 0, %s118
      %s133 = sphi 0, %s119
      %s141 = sphi 0, %s143
      %s144 = sphi 0, %s141
      %s145 = sphi 0, %s144
      %s161 = sphi 0, %s145
    $region4: #{tpu_custom_call.1} parent=1 // loop_header_branch
      %22 = sbr.rel (%p20) target = $region8
    $region5: #{tpu_custom_call.1} parent=1 // loop_body
      %s24 = ssub.s32 %s19, 1
      %s25 = ssub.s32 %s19, 2
      %s32 = sadd.s32 1, %s27
      %p33 = scmp.ge.s32.totalorder %s32, 1
      %s34 = scalar_select %p33, 0, %s32
      %s35 = sadd.s32 1, %s26
      %s36 = scalar_select %p33, %s35, %s26
      %p37 = scmp.ge.s32.totalorder %s36, 2
      %s38 = scalar_select %p37, 0, %s36
      %s39 = ssub.s32 %s26, %s38
      %s40 = ssub.s32 %s27, %s34
      %s41 = sor.u32 %s39, %s40
      %p42 = scmp.eq.s32.totalorder %s41, 0
      %s44 = sadd.s32 %s43, 1
      %s45 = scalar_select %p42, %s43, %s44
      %p48 = pneg %p42
      %p49 = scmp.eq.s32.totalorder %s19, 1
      %p50 = por %p48, %p49
      %p51 = scmp.ne.s32.totalorder %s43, %s46
      %p52 = scmp.eq.s32.totalorder %s19, 0
      %p53 = por %p51, %p52
      %p54 = scmp.ne.s32.totalorder %s43, %s46
      %p55 = scmp.eq.s32.totalorder %s24, 1
      %p56 = por %p54, %p55
      %p57 = scmp.ne.s32.totalorder %s46, %s47
      %p58 = scmp.eq.s32.totalorder %s24, 0
      %p59 = por %p57, %p58
      %p60 = scmp.ne.s32.totalorder %s46, %s47
      %p61 = scmp.eq.s32.totalorder %s25, 1
      %p62 = por %p60, %p61
      %p64 = scmp.ne.s32.totalorder %s47, %s63
      %p65 = scmp.eq.s32.totalorder %s25, 0
      %p66 = por %p64, %p65
      %s67 = ssub.s32 %s26, %s38
      %s68 = ssub.s32 %s27, %s34
      %s69 = sor.u32 %s67, %s68
      %p70 = scmp.eq.s32.totalorder %s69, 0
      %s72 = sadd.s32 %s71, 1
      %s73 = scalar_select %p70, %s71, %s72
      %p76 = pneg %p70
      %p77 = scmp.eq.s32.totalorder %s19, 1
      %p78 = por %p76, %p77
      %p79 = scmp.ne.s32.totalorder %s71, %s74
      %p80 = scmp.eq.s32.totalorder %s19, 0
      %p81 = por %p79, %p80
      %p82 = scmp.ne.s32.totalorder %s71, %s74
      %p83 = scmp.eq.s32.totalorder %s24, 1
      %p84 = por %p82, %p83
      %p85 = scmp.ne.s32.totalorder %s74, %s75
      %p86 = scmp.eq.s32.totalorder %s24, 0
      %p87 = por %p85, %p86
      %p88 = scmp.ne.s32.totalorder %s74, %s75
      %p89 = scmp.eq.s32.totalorder %s25, 1
      %p90 = por %p88, %p89
      %p92 = scmp.ne.s32.totalorder %s75, %s91
      %p93 = scmp.eq.s32.totalorder %s25, 0
      %p94 = por %p92, %p93
      %s96 = sadd.s32 %s95, 1
      %p99 = scmp.eq.s32.totalorder %s19, 1
      %p100 = scmp.ne.s32.totalorder %s95, %s97
      %p101 = scmp.eq.s32.totalorder %s19, 0
      %p102 = por %p100, %p101
      %p103 = scmp.ne.s32.totalorder %s95, %s97
      %p104 = scmp.eq.s32.totalorder %s24, 1
      %p105 = por %p103, %p104
      %p106 = scmp.ne.s32.totalorder %s97, %s98
      %p107 = scmp.eq.s32.totalorder %s24, 0
      %p108 = por %p106, %p107
      %p109 = scmp.ne.s32.totalorder %s97, %s98
      %p110 = scmp.eq.s32.totalorder %s25, 1
      %p111 = por %p109, %p110
      %p113 = scmp.ne.s32.totalorder %s98, %s112
      %p114 = scmp.eq.s32.totalorder %s25, 0
      %p115 = por %p113, %p114
      %s117 = sadd.s32 %s116, 1
      %p120 = scmp.eq.s32.totalorder %s19, 1
      %p121 = scmp.ne.s32.totalorder %s116, %s118
      %p122 = scmp.eq.s32.totalorder %s19, 0
      %p123 = por %p121, %p122
      %p124 = scmp.ne.s32.totalorder %s116, %s118
      %p125 = scmp.eq.s32.totalorder %s24, 1
      %p126 = por %p124, %p125
      %p127 = scmp.ne.s32.totalorder %s118, %s119
      %p128 = scmp.eq.s32.totalorder %s24, 0
      %p129 = por %p127, %p128
      %p130 = scmp.ne.s32.totalorder %s118, %s119
      %p131 = scmp.eq.s32.totalorder %s25, 1
      %p132 = por %p130, %p131
      %p134 = scmp.ne.s32.totalorder %s119, %s133
      %p135 = scmp.eq.s32.totalorder %s25, 0
      %p136 = por %p134, %p135
      %s137 = ssub.s32 %s26, %s38
      %s138 = ssub.s32 %s27, %s34
      %s139 = sor.u32 %s137, %s138
      %p140 = scmp.eq.s32.totalorder %s139, 0
      %s142 = sadd.s32 %s141, 1
      %s143 = scalar_select %p140, %s141, %s142
      %p146 = pneg %p140
      %p147 = scmp.eq.s32.totalorder %s19, 1
      %p148 = por %p146, %p147
      %p149 = scmp.ne.s32.totalorder %s141, %s144
      %p150 = scmp.eq.s32.totalorder %s19, 0
      %p151 = por %p149, %p150
      %p152 = scmp.ne.s32.totalorder %s141, %s144
      %p153 = scmp.eq.s32.totalorder %s24, 1
      %p154 = por %p152, %p153
      %p155 = scmp.ne.s32.totalorder %s144, %s145
      %p156 = scmp.eq.s32.totalorder %s24, 0
      %p157 = por %p155, %p156
      %p158 = scmp.ne.s32.totalorder %s144, %s145
      %p159 = scmp.eq.s32.totalorder %s25, 1
      %p160 = por %p158, %p159
      %p162 = scmp.ne.s32.totalorder %s145, %s161
      %p163 = scmp.eq.s32.totalorder %s25, 0
      %p164 = por %p162, %p163
      %p165 = scmp.le.s32.totalorder 1, %s19
      %p166 = scmp.lt.s32.totalorder %s19, 3
      %p167 = pnand %p165, %p166
      %p168 = pneg %p167
      // Predicated region
      $region9: #{tpu_custom_call.1} parent=5 // pred_check
        _
      $region10: #{tpu_custom_call.1} parent=5 // pred_check_branch
        %170 = sbr.rel (%p167) target = $region12
      $region11: #{tpu_custom_call.1} parent=5 // pred_region
        %s171 = ssub.s32 %s19, 1
        // Predicated region
        $region13: #{tpu_custom_call.1} parent=11 // pred_check
          %p172 = pneg %p108
        $region14: #{tpu_custom_call.1} parent=11 // pred_check_branch
          %174 = sbr.rel (%p172) target = $region16
        $region15: #{tpu_custom_call.1} parent=11 // pred_region
          _
        $region16: #{tpu_custom_call.1} parent=11 // pred_fallthru
          _
        // Predicated region
        $region17: #{tpu_custom_call.1} parent=11 // pred_check
          %p175 = pneg %p129
        $region18: #{tpu_custom_call.1} parent=11 // pred_check_branch
          %177 = sbr.rel (%p175) target = $region20
        $region19: #{tpu_custom_call.1} parent=11 // pred_region
          _
        $region20: #{tpu_custom_call.1} parent=11 // pred_fallthru
          _
      $region12: #{tpu_custom_call.1} parent=5 // pred_fallthru
        _
      %p178 = scmp.lt.s32.totalorder %s19, 2
      // Predicated region
      $region21: #{tpu_custom_call.1} parent=5 // pred_check
        %p179 = pneg %p178
      $region22: #{tpu_custom_call.1} parent=5 // pred_check_branch
        %181 = sbr.rel (%p179) target = $region24
      $region23: #{tpu_custom_call.1} parent=5 // pred_region
        // Predicated region
        $region25: #{tpu_custom_call.1} parent=23 // pred_check
          %p182 = pneg %p53
        $region26: #{tpu_custom_call.1} parent=23 // pred_check_branch
          %184 = sbr.rel (%p182) target = $region28
        $region27: #{tpu_custom_call.1} parent=23 // pred_region
          %s185 = sand.u32 %s43, 1
          %s186 = scalar_lea.sflag [#allocation4], %s185
          %s187 = sand.u32 %s43, 1
          %s188 = smul.addr %s187, 8
          %s189 = scalar_lea.vmem [#allocation3], %s188
          %s190 = smul.u32 2, %s27
          %s192 = ssub.s32 128, 128
          %193 = vsyncadd %s186, %s192
          %s194 = smul.addr %s26, 2
          %s195 = sadd.s32 %s190, %s194
          %s196 = smul.addr %s195, 64
          %s197 = scalar_lea.hbm %s0, %s196
          %s199 = sshll.u32 %s189, 4
          %s200 = int_to_ptr.vmem [resolvable:$true] %s199
          %202 = dma.hbm_to_vmem [thread:$0]  %s197, 128, %s200, %s186
        $region28: #{tpu_custom_call.1} parent=23 // pred_fallthru
          _
        // Predicated region
        $region29: #{tpu_custom_call.1} parent=23 // pred_check
          %p203 = pneg %p81
        $region30: #{tpu_custom_call.1} parent=23 // pred_check_branch
          %205 = sbr.rel (%p203) target = $region32
        $region31: #{tpu_custom_call.1} parent=23 // pred_region
          %s206 = sand.u32 %s71, 1
          %s207 = scalar_lea.sflag [#allocation7], %s206
          %s208 = sand.u32 %s71, 1
          %s209 = smul.addr %s208, 8
          %s210 = scalar_lea.vmem [#allocation6], %s209
          %s211 = smul.u32 2, %s27
          %s213 = ssub.s32 128, 128
          %214 = vsyncadd %s207, %s213
          %s215 = smul.addr %s26, 2
          %s216 = sadd.s32 %s211, %s215
          %s217 = smul.addr %s216, 64
          %s218 = scalar_lea.hbm %s1, %s217
          %s220 = sshll.u32 %s210, 4
          %s221 = int_to_ptr.vmem [resolvable:$true] %s220
          %223 = dma.hbm_to_vmem [thread:$0]  %s218, 128, %s221, %s207
        $region32: #{tpu_custom_call.1} parent=23 // pred_fallthru
          _
      $region24: #{tpu_custom_call.1} parent=5 // pred_fallthru
        _
      %p224 = scmp.le.s32.totalorder 1, %s19
      %p225 = scmp.lt.s32.totalorder %s19, 3
      %p226 = pnand %p224, %p225
      %p227 = pneg %p226
      // Predicated region
      $region33: #{tpu_custom_call.1} parent=5 // pred_check
        _
      $region34: #{tpu_custom_call.1} parent=5 // pred_check_branch
        %229 = sbr.rel (%p226) target = $region36
      $region35: #{tpu_custom_call.1} parent=5 // pred_region
        %s230 = ssub.s32 %s19, 1
        %s231 = sand.u32 %s46, 1
        %s232 = scalar_lea.sflag [#allocation4], %s231
        %s233 = sand.u32 %s46, 1
        %s234 = smul.addr %s233, 8
        %s235 = scalar_lea.vmem [#allocation3], %s234
        // Predicated region
        $region37: #{tpu_custom_call.1} parent=35 // pred_check
          %p236 = pneg %p59
        $region38: #{tpu_custom_call.1} parent=35 // pred_check_branch
          %238 = sbr.rel (%p236) target = $region40
        $region39: #{tpu_custom_call.1} parent=35 // pred_region
          %239 = dma.done %s232, 128
        $region40: #{tpu_custom_call.1} parent=35 // pred_fallthru
          _
        %s240 = sand.u32 %s74, 1
        %s241 = scalar_lea.sflag [#allocation7], %s240
        %s242 = sand.u32 %s74, 1
        %s243 = smul.addr %s242, 8
        %s244 = scalar_lea.vmem [#allocation6], %s243
        // Predicated region
        $region41: #{tpu_custom_call.1} parent=35 // pred_check
          %p245 = pneg %p87
        $region42: #{tpu_custom_call.1} parent=35 // pred_check_branch
          %247 = sbr.rel (%p245) target = $region44
        $region43: #{tpu_custom_call.1} parent=35 // pred_region
          %248 = dma.done %s241, 128
        $region44: #{tpu_custom_call.1} parent=35 // pred_fallthru
          _
        %s249 = sand.u32 %s46, 1
        %s250 = scalar_lea.sflag [#allocation4], %s249
        %s251 = sand.u32 %s46, 1
        %s252 = smul.addr %s251, 8
        %s253 = scalar_lea.vmem [#allocation3], %s252
        %p254 = pneg %p59
        %p255 = pneg %p56
        %s256 = sand.u32 %s74, 1
        %s257 = scalar_lea.sflag [#allocation7], %s256
        %s258 = sand.u32 %s74, 1
        %s259 = smul.addr %s258, 8
        %s260 = scalar_lea.vmem [#allocation6], %s259
        %p261 = pneg %p87
        %p262 = pneg %p84
        %p263 = pneg %p108
        %p264 = pneg %p105
        %p265 = pneg %p129
        %p266 = pneg %p126
        %p267 = pneg %p157
        %p268 = pneg %p154
        %s269 = sand.u32 %s144, 1
        %s270 = scalar_lea.sflag [#allocation5], %s269
        %s271 = sand.u32 %s144, 1
        %s272 = smul.addr %s271, 8
        %s273 = scalar_lea.vmem [#allocation8], %s272
        %s274 = smul.u32 2, %s29
        %s275 = smul.u32 2, %s29
        %s276 = smul.u32 2, %s29
        %v277 = vld [vmem:[%s3] sm:$0xf]
        %v278 = vld [vmem:[%s235] sm:$0xff]
        %v280 = vcombine.high %v278, %v278
        %vm282 = vcmask 1043456
        %v283 = vsel %vm282, %v278, 0.0
        %v284 = vsel %vm282, %v280, 0.0
        %285 = vst [vmem:[#allocation2] sm:$0xff] %v283
        %286 = vst [vmem:[#allocation2 + $0x8] sm:$0xff] %v284
        %v287 = vld [vmem:[%s244] sm:$0xff]
        %v289 = vcombine.high %v287, %v287
        %v291 = vsel %vm282, %v287, 0.0
        %v292 = vsel %vm282, %v289, 0.0
        %293 = vst [vmem:[#allocation2 + $0x10] sm:$0xff] %v291
        %294 = vst [vmem:[#allocation2 + $0x18] sm:$0xff] %v292
        %v295 = vld [vmem:[%s2] sm:$0xf]
        %v296 = vld [vmem:[#allocation2] sm:$0xff]
        %v297 = vld [vmem:[#allocation2 + $0x8] sm:$0xff]
        %v298 = vld [vmem:[#allocation2 + $0x10] sm:$0xff]
        %v299 = vld [vmem:[#allocation2 + $0x18] sm:$0xff]
        %301 = vset.pattern.permute.xlu0 0
        %302 = vperm.xlu0 %301, %v277
        %v303 = vpop.permute.xlu0 %302
        %vm305 = vcmask 130048
        %v307 = vsel %vm305, %v295, 0
        %309 = vmatprep.subr.mxu0 0.0
        %310 = vmatpush1.msra.mxu0 0.0
        %311 = vmatprep.subr.mxu0 0.0
        %312 = vmatpush1.msra.mxu0 0.0
        %313 = vmatprep.subr.mxu0 0.0
        %314 = vmatpush1.msra.mxu0 0.0
        %315 = vmatprep.subr.mxu0 0.0
        %316 = vmatpush1.msra.mxu0 0.0
        %317 = vmatprep.subr.mxu0 0.0
        %318 = vmatpush1.msra.mxu0 0.0
        %319 = vmatprep.subr.mxu0 0.0
        %320 = vmatpush1.msra.mxu0 0.0
        %321 = vmatprep.subr.mxu0 0.0
        %322 = vmatpush1.msra.mxu0 0.0
        %323 = vmatprep.subr.mxu0 0.0
        %324 = vmatpush1.msra.mxu0 0.0
        %325 = vmatprep.subr.mxu0 0.0
        %326 = vmatpush1.msra.mxu0 0.0
        %327 = vmatprep.subr.mxu0 0.0
        %328 = vmatpush1.msra.mxu0 0.0
        %329 = vmatprep.subr.mxu0 0.0
        %330 = vmatpush1.msra.mxu0 0.0
        %331 = vmatprep.subr.mxu0 0.0
        %332 = vmatpush1.msra.mxu0 0.0
        %333 = vmatprep.subr.mxu0 0.0
        %334 = vmatpush1.msra.mxu0 0.0
        %335 = vmatprep.subr.mxu0 0.0
        %336 = vmatpush1.msra.mxu0 0.0
        %337 = vmatprep.subr.mxu0 %v299
        %338 = vmatpush1.msra.mxu0 %v298
        %339 = vmatprep.subr.mxu0 %v297
        %340 = vmatpush1.msra.mxu0 %v296
        %341 = vmatprep.subr.mxu0 0.0
        %342 = vmatpush2.msra.mxu0 0.0
        %343 = vmatprep.subr.mxu0 0.0
        %344 = vmatpush2.msra.mxu0 0.0
        %345 = vmatprep.subr.mxu0 0.0
        %346 = vmatpush2.msra.mxu0 0.0
        %347 = vmatprep.subr.mxu0 0.0
        %348 = vmatpush2.msra.mxu0 0.0
        %349 = vmatprep.subr.mxu0 0.0
        %350 = vmatpush2.msra.mxu0 0.0
        %351 = vmatprep.subr.mxu0 0.0
        %352 = vmatpush2.msra.mxu0 0.0
        %353 = vmatprep.subr.mxu0 0.0
        %354 = vmatpush2.msra.mxu0 0.0
        %355 = vmatprep.subr.mxu0 0.0
        %356 = vmatpush2.msra.mxu0 0.0
        %357 = vmatprep.subr.mxu0 0.0
        %358 = vmatpush2.msra.mxu0 0.0
        %359 = vmatprep.subr.mxu0 0.0
        %360 = vmatpush2.msra.mxu0 0.0
        %361 = vmatprep.subr.mxu0 0.0
        %362 = vmatpush2.msra.mxu0 0.0
        %363 = vmatprep.subr.mxu0 0.0
        %364 = vmatpush2.msra.mxu0 0.0
        %365 = vmatprep.subr.mxu0 0.0
        %366 = vmatpush2.msra.mxu0 0.0
        %367 = vmatprep.subr.mxu0 0.0
        %368 = vmatpush2.msra.mxu0 0.0
        %369 = vmatprep.subr.mxu0 0.0
        %370 = vmatpush2.msra.mxu0 0.0
        %371 = vmatprep.subr.mxu0 0.0
        %372 = vmatpush2.msra.mxu0 0.0
        %373 = vmatprep.mubr.f32.mxu0 0.0
        %374 = vmatmul.mubr.f32.gmra.mxu0 %v307
        %v375 = vpop.f32.mrf.mxu0
        %v376 = vadd.f32 %v303, %v375
        %v377 = vpop.f32.mrf.mxu0
        %v378 = vadd.f32 %v303, %v377
        %379 = vdwg.mxu0
        %v380 = vld [vmem:[%s235] sm:$0xff]
        %v382 = vcombine.high %v380, %v380
        %v384 = vadd.f32 %v376, %v380
        %v385 = vadd.f32 %v378, %v382
        %v386 = vmax.f32 %v384, 0.0
        %v387 = vmax.f32 %v385, 0.0
        %v390 = vcombine.low %v386, %v387
        %392 = vst [vmem:[%s273] sm:$0xff] %v390
        %s393 = sand.u32 %s144, 1
        %s394 = scalar_lea.sflag [#allocation5], %s393
        %s395 = sand.u32 %s144, 1
        %s396 = smul.addr %s395, 8
        %s397 = scalar_lea.vmem [#allocation8], %s396
        // Predicated region
        $region45: #{tpu_custom_call.1} parent=35 // pred_check
          %p398 = pneg %p154
        $region46: #{tpu_custom_call.1} parent=35 // pred_check_branch
          %400 = sbr.rel (%p398) target = $region48
        $region47: #{tpu_custom_call.1} parent=35 // pred_region
          %s401 = smul.u32 2, %s29
          %s403 = ssub.s32 128, 128
          %404 = vsyncadd %s394, %s403
          %s405 = smul.addr %s28, 2
          %s406 = sadd.s32 %s401, %s405
          %s407 = smul.addr %s406, 64
          %s408 = scalar_lea.hbm %s4, %s407
          %s410 = sshll.u32 %s397, 4
          %s411 = int_to_ptr.vmem [resolvable:$true] %s410
          %413 = dma.vmem_to_hbm [thread:$0]  %s411, 128, %s408, %s394
        $region48: #{tpu_custom_call.1} parent=35 // pred_fallthru
          _
      $region36: #{tpu_custom_call.1} parent=5 // pred_fallthru
        _
      %p414 = scmp.le.s32.totalorder 2, %s19
      // Predicated region
      $region49: #{tpu_custom_call.1} parent=5 // pred_check
        %p415 = pneg %p414
      $region50: #{tpu_custom_call.1} parent=5 // pred_check_branch
        %417 = sbr.rel (%p415) target = $region52
      $region51: #{tpu_custom_call.1} parent=5 // pred_region
        %s418 = ssub.s32 %s19, 2
        // Predicated region
        $region53: #{tpu_custom_call.1} parent=51 // pred_check
          %p419 = pneg %p160
        $region54: #{tpu_custom_call.1} parent=51 // pred_check_branch
          %421 = sbr.rel (%p419) target = $region56
        $region55: #{tpu_custom_call.1} parent=51 // pred_region
          %s422 = sand.u32 %s145, 1
          %s423 = scalar_lea.sflag [#allocation5], %s422
          %s424 = sand.u32 %s145, 1
          %s425 = smul.addr %s424, 8
          %s426 = scalar_lea.vmem [#allocation8], %s425
          %427 = dma.done %s423, 128
        $region56: #{tpu_custom_call.1} parent=51 // pred_fallthru
          _
      $region52: #{tpu_custom_call.1} parent=5 // pred_fallthru
        _
    $region6: #{tpu_custom_call.1} parent=1 // loop_footer
      %s23 = sadd.s32 1, %s19
    $region7: #{tpu_custom_call.1} parent=1 // loop_footer_branch
      %18 = sbr.rel target = $region3
    $region8: #{tpu_custom_call.1} parent=1 // loop_exit
      _
    %428 = vsyncpa [#allocation4], 1
    %s429 = scalar_lea.sflag [#allocation4], 1
    %430 = vsyncpa %s429, 1
    %431 = vsyncpa [#allocation7], 1
    %s432 = scalar_lea.sflag [#allocation7], 1
    %433 = vsyncpa %s432, 1
    %434 = vsyncpa [#allocation5], 1
    %s435 = scalar_lea.sflag [#allocation5], 1
    %436 = vsyncpa %s435, 1

</llo_original>
